<compile_context>
chip_gen: v7x
topology: tpu7x:2x2x1
jax: 0.10.0
libtpu: 0.0.40
codegen_flags: <defaults>
</compile_context>

<pallas_src>
import functools

import jax
import jax.numpy as jnp
from jax.experimental import pallas as pl
from jax.experimental.pallas import tpu as pltpu

# Chunking heuristics for the materializing DMA path.
_CHUNK_THRESHOLD_BYTES = 4 << 20   # only chunk items >= 4 MiB
_MAX_CHUNKS = 4                    # few outstanding descriptors saturate HBM


def _chunk_plan(shape, dtype, max_chunks, threshold_bytes):
    """Static per-item plan: tuple of (start, size) leading-dim slices, or
    (None,) for a single whole-array DMA."""
    if len(shape) == 0:
        return (None,)
    nbytes = int(jnp.dtype(dtype).itemsize)
    for d in shape:
        nbytes *= int(d)
    lead = int(shape[0])
    if max_chunks < 2 or lead < 2 or nbytes < threshold_bytes:
        return (None,)
    n = min(int(max_chunks), lead)
    base, rem = divmod(lead, n)
    plan, start = [], 0
    for c in range(n):
        size = base + (1 if c < rem else 0)
        plan.append((start, size))
        start += size
    return tuple(plan)


def _make_copy_kernel(plans):
    """Kernel copying k HBM inputs to k HBM outputs; all sub-DMAs are issued
    back-to-back (kept in flight) before any wait."""
    k = len(plans)

    def kernel(*refs):
        # refs = (in_0 .. in_{k-1}, out_0 .. out_{k-1}, dma_sems)
        sems = refs[2 * k]
        copies = []
        s = 0
        for i, plan in enumerate(plans):
            src, dst = refs[i], refs[k + i]
            for part in plan:
                if part is None:
                    cp = pltpu.make_async_copy(src, dst, sems.at[s])
                else:
                    start, size = part  # static Python ints
                    cp = pltpu.make_async_copy(
                        src.at[pl.ds(start, size)],
                        dst.at[pl.ds(start, size)],
                        sems.at[s],
                    )
                cp.start()
                copies.append(cp)
                s += 1
        for cp in copies:
            cp.wait()

    return kernel


@functools.lru_cache(maxsize=None)
def _build_extract_copy(signature, max_chunks, threshold_bytes):
    """Build (and cache) the jitted pallas_call for a given abstract signature.

    signature: tuple of (shape_tuple, dtype_name) per selected item.
    """
    plans = tuple(
        _chunk_plan(shape, dtype, max_chunks, threshold_bytes)
        for shape, dtype in signature
    )
    k = len(signature)
    n_sems = sum(len(p) for p in plans)
    out_shape = tuple(
        jax.ShapeDtypeStruct(shape, jnp.dtype(dtype)) for shape, dtype in signature
    )
    call = pl.pallas_call(
        _make_copy_kernel(plans),
        out_shape=out_shape,
        in_specs=[pl.BlockSpec(memory_space=pl.ANY) for _ in range(k)],
        out_specs=tuple(pl.BlockSpec(memory_space=pl.ANY) for _ in range(k)),
        scratch_shapes=[pltpu.SemaphoreType.DMA((n_sems,))],
    )
    return jax.jit(call)


def extract_items_pallas(items, *, max_chunks=_MAX_CHUNKS,
                         chunk_threshold_bytes=_CHUNK_THRESHOLD_BYTES):
    """Copy each array in `items` into a fresh buffer via HBM->HBM DMA."""
    k = len(items)
    if k == 0:
        return []
    items = [jnp.asarray(t) for t in items]
    signature = tuple(
        (tuple(int(d) for d in t.shape), jnp.dtype(t.dtype).name) for t in items
    )
    fn = _build_extract_copy(signature, int(max_chunks), int(chunk_threshold_bytes))
    return list(fn(*items))


class ExtractItems:
    """JAX/Pallas equivalent of the PyTorch ExtractItems module.

    By default returns aliases of the selected items (zero cost, identical
    semantics to the PyTorch module).  With materialize=True, the selected
    items are copied into fresh buffers via the Pallas DMA kernel.
    """

    def __init__(self, indexes, materialize: bool = False):
        self.indexes = tuple(int(i) for i in indexes)
        self.materialize = bool(materialize)

    def __call__(self, x):
        # Single tensor -> wrap in a list (same as the PyTorch module).
        if isinstance(x, jax.Array):
            return [x]
        if isinstance(x, (list, tuple)):
            # Static selection: Python list indexing handles negative indexes
            # and raises IndexError on out-of-range (bounds check at trace time).
            selected = [x[i] for i in self.indexes]
            if not self.materialize:
                return selected  # zero bytes moved
            return extract_items_pallas(selected)
        raise TypeError(
            f"input must be a list or tuple of tensors, but got: {type(x)}."
        )


if __name__ == "__main__":
    key = jax.random.PRNGKey(0)
    n_items, b, c, h, w = 5, 2, 4, 16, 16
    keys = jax.random.split(key, n_items)
    seq = [jax.random.normal(keys[i], (b, c, h, w), dtype=jnp.float32)
           for i in range(n_items)]

    indexes = (0, 2, 4)

    # 1) Default path: zero-copy aliasing (matches PyTorch semantics).
    module = ExtractItems(indexes)
    out = module(seq)
    assert all(o is seq[i] for o, i in zip(out, indexes)), "alias path mismatch"

    # 2) Materializing path: fresh buffers via the HBM->HBM DMA kernel.
    module_m = ExtractItems(indexes, materialize=True)
    out_m = [jax.block_until_ready(o) for o in module_m(seq)]
    assert all(bool(jnp.array_equal(o, seq[i])) for o, i in zip(out_m, indexes)), \
        "Pallas ExtractItems mismatch vs reference selection"

    # Second call reuses the lru_cache'd jitted pallas_call (no re-trace).
    out_m2 = [jax.block_until_ready(o) for o in module_m(seq)]
    assert all(bool(jnp.array_equal(o, seq[i])) for o, i in zip(out_m2, indexes))

    # 3) Heterogeneous shapes / mixed dtypes through the kernel.
    seq2 = [
        jax.random.normal(keys[0], (b, c, h, w), dtype=jnp.float32),
        jax.random.normal(keys[1], (b, 2 * c, h, w), dtype=jnp.float32),
        jax.random.normal(keys[2], (b, c, 2 * h, w), dtype=jnp.bfloat16),
    ]
    module2 = ExtractItems((2, 0), materialize=True)
    out2 = [jax.block_until_ready(o) for o in module2(seq2)]
    assert bool(jnp.array_equal(out2[0], seq2[2]))
    assert bool(jnp.array_equal(out2[1], seq2[0]))

    # 4) Exercise the chunked multi-DMA path (force 2 sub-DMAs per item).
    chunked = extract_items_pallas([seq[1], seq[3]],
                                   max_chunks=2, chunk_threshold_bytes=0)
    chunked = [jax.block_until_ready(o) for o in chunked]
    assert bool(jnp.array_equal(chunked[0], seq[1]))
    assert bool(jnp.array_equal(chunked[1], seq[3]))

    # 5) Single-tensor passthrough branch.
    single = module(seq[0])
    assert len(single) == 1 and single[0] is seq[0]

    print("KERNEL_OK")
</pallas_src>

<mosaic_0001>
module attributes {stable_mosaic.version = 11 : i64} {
  func.func @kernel(%arg0: memref<2x4x16x16xf32, #tpu.memory_space<any>>, %arg1: memref<2x4x16x16xf32, #tpu.memory_space<any>>, %arg2: memref<2x4x16x16xf32, #tpu.memory_space<any>>, %arg3: memref<2x4x16x16xf32, #tpu.memory_space<any>>, %arg4: memref<2x4x16x16xf32, #tpu.memory_space<any>>, %arg5: memref<2x4x16x16xf32, #tpu.memory_space<any>>, %arg6: memref<3x!tpu.dma_semaphore, #tpu.memory_space<semaphore_mem>>) attributes {dimension_semantics = [], scalar_prefetch = 0 : i64, scratch_operands = 1 : i64, tpu.core_type = #tpu.core_type<tc>} {
    %c0_i32 = arith.constant 0 : i32
    %0 = tpu.memref_slice %arg6[%c0_i32] : memref<3x!tpu.dma_semaphore, #tpu.memory_space<semaphore_mem>> -> memref<1x!tpu.dma_semaphore, #tpu.memory_space<semaphore_mem>>
    %1 = tpu.memref_squeeze %0 : memref<1x!tpu.dma_semaphore, #tpu.memory_space<semaphore_mem>> -> memref<!tpu.dma_semaphore, #tpu.memory_space<semaphore_mem>>
    tpu.enqueue_dma source(%arg0 : memref<2x4x16x16xf32, #tpu.memory_space<any>>) target(%arg3 : memref<2x4x16x16xf32, #tpu.memory_space<any>>) target_semaphore(%1 : memref<!tpu.dma_semaphore, #tpu.memory_space<semaphore_mem>>)
    %c1_i32 = arith.constant 1 : i32
    %2 = tpu.memref_slice %arg6[%c1_i32] : memref<3x!tpu.dma_semaphore, #tpu.memory_space<semaphore_mem>> -> memref<1x!tpu.dma_semaphore, #tpu.memory_space<semaphore_mem>>
    %3 = tpu.memref_squeeze %2 : memref<1x!tpu.dma_semaphore, #tpu.memory_space<semaphore_mem>> -> memref<!tpu.dma_semaphore, #tpu.memory_space<semaphore_mem>>
    tpu.enqueue_dma source(%arg1 : memref<2x4x16x16xf32, #tpu.memory_space<any>>) target(%arg4 : memref<2x4x16x16xf32, #tpu.memory_space<any>>) target_semaphore(%3 : memref<!tpu.dma_semaphore, #tpu.memory_space<semaphore_mem>>)
    %c2_i32 = arith.constant 2 : i32
    %4 = tpu.memref_slice %arg6[%c2_i32] : memref<3x!tpu.dma_semaphore, #tpu.memory_space<semaphore_mem>> -> memref<1x!tpu.dma_semaphore, #tpu.memory_space<semaphore_mem>>
    %5 = tpu.memref_squeeze %4 : memref<1x!tpu.dma_semaphore, #tpu.memory_space<semaphore_mem>> -> memref<!tpu.dma_semaphore, #tpu.memory_space<semaphore_mem>>
    tpu.enqueue_dma source(%arg2 : memref<2x4x16x16xf32, #tpu.memory_space<any>>) target(%arg5 : memref<2x4x16x16xf32, #tpu.memory_space<any>>) target_semaphore(%5 : memref<!tpu.dma_semaphore, #tpu.memory_space<semaphore_mem>>)
    %c0_i32_0 = arith.constant 0 : i32
    %6 = tpu.memref_slice %arg6[%c0_i32_0] : memref<3x!tpu.dma_semaphore, #tpu.memory_space<semaphore_mem>> -> memref<1x!tpu.dma_semaphore, #tpu.memory_space<semaphore_mem>>
    %7 = tpu.memref_squeeze %6 : memref<1x!tpu.dma_semaphore, #tpu.memory_space<semaphore_mem>> -> memref<!tpu.dma_semaphore, #tpu.memory_space<semaphore_mem>>
    tpu.wait_dma2 semaphore(%7 : memref<!tpu.dma_semaphore, #tpu.memory_space<semaphore_mem>>) src(%arg0 : memref<2x4x16x16xf32, #tpu.memory_space<any>>) dst(%arg3 : memref<2x4x16x16xf32, #tpu.memory_space<any>>)
    %c1_i32_1 = arith.constant 1 : i32
    %8 = tpu.memref_slice %arg6[%c1_i32_1] : memref<3x!tpu.dma_semaphore, #tpu.memory_space<semaphore_mem>> -> memref<1x!tpu.dma_semaphore, #tpu.memory_space<semaphore_mem>>
    %9 = tpu.memref_squeeze %8 : memref<1x!tpu.dma_semaphore, #tpu.memory_space<semaphore_mem>> -> memref<!tpu.dma_semaphore, #tpu.memory_space<semaphore_mem>>
    tpu.wait_dma2 semaphore(%9 : memref<!tpu.dma_semaphore, #tpu.memory_space<semaphore_mem>>) src(%arg1 : memref<2x4x16x16xf32, #tpu.memory_space<any>>) dst(%arg4 : memref<2x4x16x16xf32, #tpu.memory_space<any>>)
    %c2_i32_2 = arith.constant 2 : i32
    %10 = tpu.memref_slice %arg6[%c2_i32_2] : memref<3x!tpu.dma_semaphore, #tpu.memory_space<semaphore_mem>> -> memref<1x!tpu.dma_semaphore, #tpu.memory_space<semaphore_mem>>
    %11 = tpu.memref_squeeze %10 : memref<1x!tpu.dma_semaphore, #tpu.memory_space<semaphore_mem>> -> memref<!tpu.dma_semaphore, #tpu.memory_space<semaphore_mem>>
    tpu.wait_dma2 semaphore(%11 : memref<!tpu.dma_semaphore, #tpu.memory_space<semaphore_mem>>) src(%arg2 : memref<2x4x16x16xf32, #tpu.memory_space<any>>) dst(%arg5 : memref<2x4x16x16xf32, #tpu.memory_space<any>>)
    return
  }
}

</mosaic_0001>

<llo_original>
// kernel: tpu_custom_call.1
$region0: #{tpu_custom_call.1}
  #allocation0 [shape = 'u32[]', space=smem, size = 0x4, offset = 0x4, fixed_abs, tag = 'smem constant byte address 0x4 - core index']
  #allocation1 [shape = 'u32[144,128]{1,0:T(1,128)}', space=vmem, size = 0x12000, scoped, tag = 'internal scratch']
  #allocation2 [shape = 's32[3]{0}', space=sflag, size = 0xc, scoped, tag = 'scratch operand']
  #allocation3 [shape = 's32[]', space=sflag, size = 0x4, offset = 0, fixed_abs, tag = 'sflag constant byte address 0x0 - dummy sync flag']
  #allocation4 [shape = 'u32[0]{0}', space=smem, size = 0, offset = 0, fixed_abs, tag = 'smem constant byte address 0x0 - null']
  #allocation5 [shape = 's32[]', space=sflag, size = 0x4, offset = 0, fixed_abs, tag = 'sflag constant byte address 0x0 - dummy sync flag']
  #allocation6 [shape = 'u32[0]{0}', space=smem, size = 0, offset = 0, fixed_abs, tag = 'smem constant byte address 0x0 - null']
  #allocation7 [shape = 's32[]', space=sflag, size = 0x4, offset = 0, fixed_abs, tag = 'sflag constant byte address 0x0 - dummy sync flag']
  #allocation8 [shape = 'u32[0]{0}', space=smem, size = 0, offset = 0, fixed_abs, tag = 'smem constant byte address 0x0 - null']
  %s0 = inlined_call_operand.hbm [shape: f32[2,4,16,16], index: 0, kind: input, shape index: {}]
  %s1 = inlined_call_operand.hbm [shape: f32[2,4,16,16], index: 1, kind: input, shape index: {}]
  %s2 = inlined_call_operand.hbm [shape: f32[2,4,16,16], index: 2, kind: input, shape index: {}]
  %s3 = inlined_call_operand.hbm [shape: f32[2,4,16,16], index: 3, kind: output, shape index: {0}]
  %s4 = inlined_call_operand.hbm [shape: f32[2,4,16,16], index: 4, kind: output, shape index: {1}]
  %s5 = inlined_call_operand.hbm [shape: f32[2,4,16,16], index: 5, kind: output, shape index: {2}]
  %6 = xla_tuple %s3, %s4, %s5
  %s7 = sld [smem:[#allocation0]]
  $region2: #{tpu_custom_call.1} parent=0
    _
  %s9 = ssub.s32 1, %s7
  %s10 = scalar_select 0, %s9, %s7
  %s12 = sshll.u32 1, 14
  %s13 = sxor.u32 4294967295, %s12
  %s16 = sshll.u32 3, 24
  %s17 = sxor.u32 4294967295, %s16
  %s18 = sand.u32 0, %s17
  %s20 = sor.u32 %s18, 0
  %23 = dma.general %s0, 2048, %s3, [#allocation2], [#allocation3], [#allocation4], %s20, 0
  %s24 = scalar_lea.sflag [#allocation2], 1
  %s26 = sshll.u32 1, 14
  %s27 = sxor.u32 4294967295, %s26
  %s30 = sshll.u32 3, 24
  %s31 = sxor.u32 4294967295, %s30
  %s32 = sand.u32 0, %s31
  %s34 = sor.u32 %s32, 0
  %37 = dma.general %s1, 2048, %s4, %s24, [#allocation5], [#allocation6], %s34, 0
  %s38 = scalar_lea.sflag [#allocation2], 2
  %s40 = sshll.u32 1, 14
  %s41 = sxor.u32 4294967295, %s40
  %s44 = sshll.u32 3, 24
  %s45 = sxor.u32 4294967295, %s44
  %s46 = sand.u32 0, %s45
  %s48 = sor.u32 %s46, 0
  %51 = dma.general %s2, 2048, %s5, %s38, [#allocation7], [#allocation8], %s48, 0
  %s52 = smul.u32 2, 4
  %s53 = smul.u32 %s52, 16
  %s54 = smul.u32 %s53, 1
  %s55 = sshll.u32 %s54, 4
  %56 = dma.done [#allocation2], %s55
  %s57 = sshll.u32 %s54, 4
  %58 = dma.done %s24, %s57
  %s59 = sshll.u32 %s54, 4
  %60 = dma.done %s38, %s59
  %61 = vsyncmov [#allocation2]
  %s62 = vpop.sfrf %61
  %p63 = scmp.eq.s32.totalorder %s62, 0
  %p64 = pneg %p63
  %66 = shalt.err (%p64)
  %s67 = scalar_lea.sflag [#allocation2], 1
  %68 = vsyncmov %s67
  %s69 = vpop.sfrf %68
  %p70 = scmp.eq.s32.totalorder %s69, 0
  %p71 = pneg %p70
  %73 = shalt.err (%p71)
  %s74 = scalar_lea.sflag [#allocation2], 2
  %75 = vsyncmov %s74
  %s76 = vpop.sfrf %75
  %p77 = scmp.eq.s32.totalorder %s76, 0
  %p78 = pneg %p77
  %80 = shalt.err (%p78)

</llo_original>
